<compile_context>
chip_gen: v7x
topology: tpu7x:2x2x1
jax: 0.10.0
libtpu: 0.0.40
codegen_flags: <defaults>
</compile_context>

<pallas_src>
import jax
import jax.numpy as jnp
from jax.experimental import pallas as pl
from jax.experimental.pallas import tpu as pltpu

_LANES = 128


def _cdiv(a, b):
    return -(-a // b)


def _mul_zero_kernel(x_ref, o_ref):
    # Faithful x.mul(0.0): preserves NaN/Inf/-0 propagation of the reference.
    o_ref[...] = x_ref[...] * jnp.zeros((), dtype=x_ref.dtype)


def _fill_zero_kernel(x_hbm_ref, o_ref):
    # Write-only zero fill; x stays untouched in HBM (memory_space=pl.ANY).
    del x_hbm_ref
    o_ref[...] = jnp.zeros_like(o_ref)


def _row_tile(rows, itemsize, block_bytes):
    """Pick (R, num_blocks): R multiple of 8 and ~block_bytes per (R,128) block."""
    r_target = max(8, (block_bytes // (_LANES * itemsize)) // 8 * 8)
    if rows <= r_target:
        # Single block equal to the full array dims (always a legal BlockSpec).
        return rows, 1
    return r_target, _cdiv(rows, r_target)


def zero_forward(x, stride=1, *, exact_mul_semantics=True,
                 block_bytes=2 * 1024 * 1024):
    """Pallas implementation of Zero.forward for NCHW input."""
    N, C, H, W = x.shape
    if stride == 1:
        Hs, Ws = H, W
    else:
        Hs, Ws = _cdiv(H, stride), _cdiv(W, stride)
    out_nchw = (N, C, Hs, Ws)
    total = N * C * Hs * Ws
    dtype = x.dtype
    itemsize = jnp.dtype(dtype).itemsize

    rows = _cdiv(total, _LANES)          # lane-dense rows of the flat tensor
    pad = rows * _LANES - total          # tail padding if total % 128 != 0
    R, nb = _row_tile(rows, itemsize, block_bytes)

    out_spec = pl.BlockSpec((R, _LANES), lambda i: (i, 0))
    cparams = pltpu.CompilerParams(dimension_semantics=("parallel",))

    if exact_mul_semantics:
        # Faithful path: read the (possibly strided-sliced) elements and
        # multiply by 0 so NaN/Inf/-0 propagate exactly like torch.mul(0.0).
        xs = x if stride == 1 else x[:, :, ::stride, ::stride]
        flat = xs.reshape(-1)
        if pad:
            # Rare unaligned case (total % 128 != 0): pad to a lane-dense slab,
            # cropped again below.
            flat = jnp.pad(flat, (0, pad))
        x2d = flat.reshape(rows, _LANES)
        out2d = pl.pallas_call(
            _mul_zero_kernel,
            out_shape=jax.ShapeDtypeStruct((rows, _LANES), dtype),
            grid=(nb,),
            in_specs=[pl.BlockSpec((R, _LANES), lambda i: (i, 0))],
            out_specs=out_spec,
            compiler_params=cparams,
        )(x2d)
    else:
        # Fast path: pure write-only fill.  x is never DMA'd or sliced; only
        # the output slab is streamed to HBM (store-bandwidth roofline).
        out2d = pl.pallas_call(
            _fill_zero_kernel,
            out_shape=jax.ShapeDtypeStruct((rows, _LANES), dtype),
            grid=(nb,),
            in_specs=[pl.BlockSpec(memory_space=pl.ANY)],
            out_specs=out_spec,
            compiler_params=cparams,
        )(x)

    out_flat = out2d.reshape(-1)
    if pad:
        out_flat = out_flat[:total]
    return out_flat.reshape(out_nchw)


def reference_zero(x, stride):
    """Pure-JAX reference mirroring the PyTorch forward."""
    if stride == 1:
        return x * 0.0
    return x[:, :, ::stride, ::stride] * 0.0


if __name__ == "__main__":
    key = jax.random.PRNGKey(0)

    # Spec-sized example.
    x = jax.random.normal(key, (2, 4, 16, 16), dtype=jnp.float32)
    # Unaligned total (total % 128 != 0) to exercise the pad/crop path.
    x_odd = jax.random.normal(jax.random.PRNGKey(1), (2, 3, 7, 5),
                              dtype=jnp.float32)
    # Shape whose row count does not divide the row tile when block_bytes is
    # tiny -> exercises the multi-block cdiv grid with a masked edge block.
    x_edge = jax.random.normal(jax.random.PRNGKey(2), (2, 4, 16, 20),
                               dtype=jnp.float32)

    for xi in (x, x_odd):
        for s in (1, 2):
            ref = reference_zero(xi, s)
            out = jax.block_until_ready(zero_forward(xi, s))           # faithful
            assert out.shape == ref.shape and out.dtype == ref.dtype
            assert jnp.array_equal(out, ref), (xi.shape, s, "faithful mismatch")

            out_fast = jax.block_until_ready(
                zero_forward(xi, s, exact_mul_semantics=False))        # write-only
            assert out_fast.shape == ref.shape and out_fast.dtype == ref.dtype
            assert jnp.array_equal(out_fast, ref), (xi.shape, s, "fast mismatch")

    # Multi-block grid + masked edge block (rows=20, R=8, nb=3).
    for exact in (True, False):
        ref = reference_zero(x_edge, 1)
        out = jax.block_until_ready(
            zero_forward(x_edge, 1, exact_mul_semantics=exact, block_bytes=4096))
        assert out.shape == ref.shape
        assert jnp.array_equal(out, ref), ("edge-block mismatch", exact)

    print("KERNEL_OK")
</pallas_src>

<mosaic_0001>
module attributes {stable_mosaic.version = 11 : i64} {
  func.func @_mul_zero_kernel(%arg0: i32, %arg1: memref<16x128xf32, #tpu.memory_space<vmem>>, %arg2: memref<16x128xf32, #tpu.memory_space<vmem>>) attributes {dimension_semantics = [#tpu.dimension_semantics<parallel>], iteration_bounds = array<i64: 1>, scalar_prefetch = 0 : i64, scratch_operands = 0 : i64, tpu.core_type = #tpu.core_type<tc>, window_params = [{transform_indices = @transform_0, window_bounds = array<i64: 16, 128>}, {transform_indices = @transform_1, window_bounds = array<i64: 16, 128>}]} {
    %c0 = arith.constant 0 : index
    %c0_0 = arith.constant 0 : index
    %0 = vector.load %arg1[%c0, %c0_0] : memref<16x128xf32, #tpu.memory_space<vmem>>, vector<16x128xf32>
    %cst = arith.constant 0.000000e+00 : f32
    %1 = vector.broadcast %cst : f32 to vector<16x128xf32>
    %2 = arith.mulf %0, %1 : vector<16x128xf32>
    %c0_1 = arith.constant 0 : index
    %c0_2 = arith.constant 0 : index
    %3 = vector.load %arg2[%c0_1, %c0_2] : memref<16x128xf32, #tpu.memory_space<vmem>>, vector<16x128xf32>
    tpu.vector_store %arg2[%c0_1, %c0_2], %2 {strides = array<i32>} : memref<16x128xf32, #tpu.memory_space<vmem>>, vector<16x128xf32>,
    return
  }
  func.func @transform_0(%arg0: i32) -> (i32, i32) {
    %c0_i32 = arith.constant 0 : i32
    %c0_i32_0 = arith.constant 0 : i32
    return %arg0, %c0_i32 : i32, i32
  }
  func.func @transform_1(%arg0: i32) -> (i32, i32) {
    %c0_i32 = arith.constant 0 : i32
    %c0_i32_0 = arith.constant 0 : i32
    return %arg0, %c0_i32 : i32, i32
  }
}

</mosaic_0001>

<llo_original>
// kernel: tpu_custom_call.1
$region0: #{tpu_custom_call.1}
  #allocation0 [shape = 'u32[]', space=smem, size = 0x4, offset = 0x4, fixed_abs, tag = 'smem constant byte address 0x4 - core index']
  #allocation1 [shape = 'u32[144,128]{1,0:T(1,128)}', space=vmem, size = 0x12000, scoped, tag = 'internal scratch']
  %s0 = inlined_call_operand.hbm [shape: f32[16,128], index: 0, kind: input, shape index: {}]
  %s1 = inlined_call_operand.hbm [shape: f32[16,128], index: 1, kind: output, shape index: {}]
  %s2 = sld [smem:[#allocation0]]
  $region18: #{tpu_custom_call.1} parent=0
    _
  %s4 = ssub.s32 1, %s2
  %s5 = scalar_select 0, %s4, %s2
  $region1: #{tpu_custom_call.1} parent=0
    #allocation2 [shape = 'u8[8192]{0}', space=vmem, size = 0x2000, scoped, tag = 'input window, operand 0, single buffered']
    #allocation3 [shape = 's32[1]{0}', space=sflag, size = 0x4, scoped, tag = 'scoped memory for tpu_custom_call.1']
    #allocation4 [shape = 's32[1]{0}', space=sflag, size = 0x4, scoped, tag = 'scoped memory for tpu_custom_call.1']
    #allocation5 [shape = 'u8[8192]{0}', space=vmem, size = 0x2000, scoped, tag = 'output window, operand 0, single buffered']
    %6 = vsyncpa [#allocation3], 0
    %7 = vsyncpa [#allocation4], 0
    // Predicated region
    $region2: #{tpu_custom_call.1} parent=1 // pred_check
      _
    $region3: #{tpu_custom_call.1} parent=1 // pred_check_branch
      %9 = sbr.rel (0) target = $region5
    $region4: #{tpu_custom_call.1} parent=1 // pred_region
      %s11 = ssub.s32 256, 256
      %12 = vsyncadd [#allocation3], %s11
      %s13 = sshll.u32 [#allocation2], 4
      %s14 = int_to_ptr.vmem [resolvable:$true] %s13
      %19 = dma.hbm_to_vmem [thread:$0]  %s0, 256, %s14, [#allocation3], 128, 128, 8
    $region5: #{tpu_custom_call.1} parent=1 // pred_fallthru
      _
    // Predicated region
    $region6: #{tpu_custom_call.1} parent=1 // pred_check
      _
    $region7: #{tpu_custom_call.1} parent=1 // pred_check_branch
      %21 = sbr.rel (0) target = $region9
    $region8: #{tpu_custom_call.1} parent=1 // pred_region
      %22 = dma.done [#allocation3], 256
    $region9: #{tpu_custom_call.1} parent=1 // pred_fallthru
      _
    %v23 = vld [vmem:[#allocation2] sm:$0xff]
    %v24 = vld [vmem:[#allocation2 + $0x8] sm:$0xff]
    %v25 = vmul.f32 %v23, 0.0
    %v26 = vmul.f32 %v24, 0.0
    %27 = vst [vmem:[#allocation5] sm:$0xff] %v25
    %28 = vst [vmem:[#allocation5 + $0x8] sm:$0xff] %v26
    // Predicated region
    $region10: #{tpu_custom_call.1} parent=1 // pred_check
      _
    $region11: #{tpu_custom_call.1} parent=1 // pred_check_branch
      %30 = sbr.rel (0) target = $region13
    $region12: #{tpu_custom_call.1} parent=1 // pred_region
      %s32 = ssub.s32 256, 256
      %33 = vsyncadd [#allocation4], %s32
      %s34 = sshll.u32 [#allocation5], 4
      %s35 = int_to_ptr.vmem [resolvable:$true] %s34
      %40 = dma.vmem_to_hbm [thread:$0]  %s35, 256, %s1, [#allocation4], 128, 128, 8
    $region13: #{tpu_custom_call.1} parent=1 // pred_fallthru
      _
    // Predicated region
    $region14: #{tpu_custom_call.1} parent=1 // pred_check
      _
    $region15: #{tpu_custom_call.1} parent=1 // pred_check_branch
      %42 = sbr.rel (0) target = $region17
    $region16: #{tpu_custom_call.1} parent=1 // pred_region
      %43 = dma.done [#allocation4], 256
    $region17: #{tpu_custom_call.1} parent=1 // pred_fallthru
      _
    %44 = vsyncpa [#allocation3], 1
    %45 = vsyncpa [#allocation4], 1

</llo_original>
